<compile_context>
chip_gen: v5e
topology: v5e:2x2
jax: 0.10.0
libtpu: 0.0.40
codegen_flags: <defaults>
</compile_context>

<pallas_src>
import numpy as np
import jax
import jax.numpy as jnp
from jax.experimental import pallas as pl
from jax.experimental.pallas import tpu as pltpu


# Logical layer sizes of the PyTorch module.
K_IN, H1, H2, N_OUT = 3, 128, 64, 6
NP8 = 8        # HBM output lane padding (6 -> 8)
NP128 = 128    # in-register / VMEM lane padding of w3 (never DMA'd to HBM out)


def _round_up(x, m):
    return (x + m - 1) // m * m


def _cdiv(a, b):
    return (a + b - 1) // b


# ---------------------------------------------------------------------------
# Fused MLP kernel: o = (relu(relu(x@w1+b1)@w2+b2))@w3 + b3
# Weights / biases are full-array VMEM-resident blocks; x/o tile over batch.
# ---------------------------------------------------------------------------
def _mlp_kernel(x_ref, w1_ref, b1_ref, w2_ref, b2_ref, w3_ref, b3_ref, o_ref):
    x = x_ref[...]                                    # (tm, 3)   f32
    w1 = w1_ref[...]                                  # (3, 128)  f32

    # Layer 1 on the VPU (K=3 is far too shallow to be worth an MXU push).
    h1 = (x[:, 0:1] * w1[0:1, :]
          + x[:, 1:2] * w1[1:2, :]
          + x[:, 2:3] * w1[2:3, :]
          + b1_ref[...])                              # (tm, 128) f32
    h1 = jnp.maximum(h1, 0.0)

    # Layer 2 on the MXU: bf16 operands, f32 accumulation.
    h2 = jnp.dot(h1.astype(jnp.bfloat16), w2_ref[...],
                 preferred_element_type=jnp.float32) + b2_ref[...]   # (tm, 64)
    h2 = jnp.maximum(h2, 0.0)

    # Layer 3 on the MXU.  w3 is lane-padded to 128 only inside VMEM (same
    # single MXU pass either way); only the first 8 lanes are stored to HBM.
    out = jnp.dot(h2.astype(jnp.bfloat16), w3_ref[...],
                  preferred_element_type=jnp.float32)                # (tm, 128)
    o_ref[...] = (out[:, :NP8] + b3_ref[...]).astype(o_ref.dtype)    # (tm, 8)


def particle_information_net_pallas(x, params, *, tm_max=2048):
    """Pallas path: x (B, 3) f32 -> (B, 6) f32.  Matches the PyTorch forward."""
    B, k = x.shape
    assert k == K_IN

    # Batch tiling: pad B only up to step granularity (a few rows), and keep
    # >= 2 (even) grid steps once B >= 16 so the "parallel" batch axis can be
    # sharded across both v7x TensorCores.
    B8 = _round_up(B, 8)
    ns = _cdiv(B8, tm_max)
    if B8 >= 16:
        ns = max(ns, 2)
        if ns % 2:
            ns += 1
    tm = _round_up(_cdiv(B8, ns), 8)
    Bp = ns * tm                       # Bp - B is at most a handful of rows

    xp = jnp.pad(x.astype(jnp.float32), ((0, Bp - B), (0, 0)))            # (Bp, 3)
    w1 = params["w1"].astype(jnp.float32)                                 # (3, 128)
    b1 = params["b1"].reshape(1, H1).astype(jnp.float32)                  # (1, 128)
    w2 = params["w2"].astype(jnp.bfloat16)                                # (128, 64)
    b2 = params["b2"].reshape(1, H2).astype(jnp.float32)                  # (1, 64)
    w3 = jnp.pad(params["w3"],
                 ((0, 0), (0, NP128 - N_OUT))).astype(jnp.bfloat16)       # (64, 128)
    b3 = jnp.pad(params["b3"],
                 (0, NP8 - N_OUT)).reshape(1, NP8).astype(jnp.float32)    # (1, 8)

    out = pl.pallas_call(
        _mlp_kernel,
        out_shape=jax.ShapeDtypeStruct((Bp, NP8), jnp.float32),
        grid_spec=pltpu.PrefetchScalarGridSpec(
            num_scalar_prefetch=0,
            grid=(Bp // tm,),
            in_specs=[
                pl.BlockSpec((tm, K_IN), lambda i: (i, 0)),    # x tile (tm, 3)
                pl.BlockSpec((K_IN, H1), lambda i: (0, 0)),    # w1 (resident)
                pl.BlockSpec((1, H1), lambda i: (0, 0)),       # b1
                pl.BlockSpec((H1, H2), lambda i: (0, 0)),      # w2 (resident)
                pl.BlockSpec((1, H2), lambda i: (0, 0)),       # b2
                pl.BlockSpec((H2, NP128), lambda i: (0, 0)),   # w3 (resident)
                pl.BlockSpec((1, NP8), lambda i: (0, 0)),      # b3
            ],
            out_specs=pl.BlockSpec((tm, NP8), lambda i: (i, 0)),
        ),
        compiler_params=pltpu.CompilerParams(
            dimension_semantics=("parallel",)),
    )(xp, w1, b1, w2, b2, w3, b3)

    return out[:B, :N_OUT]


# Pure-JAX reference (no Pallas) — also used as the tiny-batch dispatch path.
def reference_forward(x, params):
    h = jnp.maximum(x @ params["w1"] + params["b1"], 0.0)
    h = jnp.maximum(h @ params["w2"] + params["b2"], 0.0)
    return h @ params["w3"] + params["b3"]


def particle_information_net(x, params, *, tm_max=2048, min_pallas_batch=256):
    """Dispatcher: plain-XLA for tiny batches, fused Pallas kernel otherwise."""
    if x.shape[0] < min_pallas_batch:
        return reference_forward(x, params)
    return particle_information_net_pallas(x, params, tm_max=tm_max)


forward_pallas = jax.jit(particle_information_net_pallas)
forward = jax.jit(particle_information_net)


def init_params(key):
    ks = jax.random.split(key, 6)

    def lin_w(k, fin, fout):
        # Roughly matches PyTorch nn.Linear default init (U(-1/sqrt(fin), ..)).
        bound = 1.0 / np.sqrt(fin)
        return jax.random.uniform(k, (fin, fout), jnp.float32, -bound, bound)

    def lin_b(k, fin, fout):
        bound = 1.0 / np.sqrt(fin)
        return jax.random.uniform(k, (fout,), jnp.float32, -bound, bound)

    return {
        "w1": lin_w(ks[0], K_IN, H1),   "b1": lin_b(ks[1], K_IN, H1),
        "w2": lin_w(ks[2], H1, H2),     "b2": lin_b(ks[3], H1, H2),
        "w3": lin_w(ks[4], H2, N_OUT),  "b3": lin_b(ks[5], H2, N_OUT),
    }


if __name__ == "__main__":
    key = jax.random.PRNGKey(0)
    k_in, k_in2, k_par = jax.random.split(key, 3)

    params = init_params(k_par)

    # Small batch: run the Pallas kernel directly and check against reference.
    B = 8
    x = jax.random.normal(k_in, (B, K_IN), jnp.float32)
    out = jax.block_until_ready(forward_pallas(x, params))
    assert out.shape == (B, N_OUT), out.shape
    assert np.isfinite(np.asarray(out)).all()
    ref = jax.block_until_ready(reference_forward(x, params))
    np.testing.assert_allclose(np.asarray(out), np.asarray(ref),
                               rtol=1e-2, atol=1e-2)

    # Larger batch through the dispatcher: exercises the 2-step parallel grid.
    B2 = 512
    x2 = jax.random.normal(k_in2, (B2, K_IN), jnp.float32)
    out2 = jax.block_until_ready(forward(x2, params))
    assert out2.shape == (B2, N_OUT), out2.shape
    ref2 = jax.block_until_ready(reference_forward(x2, params))
    np.testing.assert_allclose(np.asarray(out2), np.asarray(ref2),
                               rtol=1e-2, atol=1e-2)

    print("KERNEL_OK")
</pallas_src>

<mosaic_0001>
module attributes {stable_mosaic.version = 11 : i64} {
  func.func @_mlp_kernel(%arg0: i32, %arg1: memref<8x3xf32, #tpu.memory_space<vmem>>, %arg2: memref<3x128xf32, #tpu.memory_space<vmem>>, %arg3: memref<1x128xf32, #tpu.memory_space<vmem>>, %arg4: memref<128x64xbf16, #tpu.memory_space<vmem>>, %arg5: memref<1x64xf32, #tpu.memory_space<vmem>>, %arg6: memref<64x128xbf16, #tpu.memory_space<vmem>>, %arg7: memref<1x8xf32, #tpu.memory_space<vmem>>, %arg8: memref<8x8xf32, #tpu.memory_space<vmem>>) attributes {dimension_semantics = [#tpu.dimension_semantics<parallel>], iteration_bounds = array<i64: 1>, scalar_prefetch = 0 : i64, scratch_operands = 0 : i64, tpu.core_type = #tpu.core_type<tc>, window_params = [{transform_indices = @transform_0, window_bounds = array<i64: 8, 3>}, {pipeline_mode = #tpu.pipeline_mode<synchronous>, transform_indices = @transform_1, window_bounds = array<i64: 3, 128>}, {pipeline_mode = #tpu.pipeline_mode<synchronous>, transform_indices = @transform_2, window_bounds = array<i64: 1, 128>}, {pipeline_mode = #tpu.pipeline_mode<synchronous>, transform_indices = @transform_3, window_bounds = array<i64: 128, 64>}, {pipeline_mode = #tpu.pipeline_mode<synchronous>, transform_indices = @transform_4, window_bounds = array<i64: 1, 64>}, {pipeline_mode = #tpu.pipeline_mode<synchronous>, transform_indices = @transform_5, window_bounds = array<i64: 64, 128>}, {pipeline_mode = #tpu.pipeline_mode<synchronous>, transform_indices = @transform_6, window_bounds = array<i64: 1, 8>}, {transform_indices = @transform_7, window_bounds = array<i64: 8, 8>}]} {
    %c0 = arith.constant 0 : index
    %c0_0 = arith.constant 0 : index
    %0 = vector.load %arg1[%c0, %c0_0] : memref<8x3xf32, #tpu.memory_space<vmem>>, vector<8x3xf32>
    %c0_1 = arith.constant 0 : index
    %c0_2 = arith.constant 0 : index
    %1 = vector.load %arg2[%c0_1, %c0_2] : memref<3x128xf32, #tpu.memory_space<vmem>>, vector<3x128xf32>
    %2 = vector.extract_strided_slice %0 {offsets = [0, 0], sizes = [8, 1], strides = [1, 1]} : vector<8x3xf32> to vector<8x1xf32>
    %3 = vector.extract_strided_slice %1 {offsets = [0, 0], sizes = [1, 128], strides = [1, 1]} : vector<3x128xf32> to vector<1x128xf32>
    %4 = vector.broadcast %2 : vector<8x1xf32> to vector<8x128xf32>
    %5 = vector.broadcast %3 : vector<1x128xf32> to vector<8x128xf32>
    %6 = arith.mulf %4, %5 : vector<8x128xf32>
    %7 = vector.extract_strided_slice %0 {offsets = [0, 1], sizes = [8, 1], strides = [1, 1]} : vector<8x3xf32> to vector<8x1xf32>
    %8 = vector.extract_strided_slice %1 {offsets = [1, 0], sizes = [1, 128], strides = [1, 1]} : vector<3x128xf32> to vector<1x128xf32>
    %9 = vector.broadcast %7 : vector<8x1xf32> to vector<8x128xf32>
    %10 = vector.broadcast %8 : vector<1x128xf32> to vector<8x128xf32>
    %11 = arith.mulf %9, %10 : vector<8x128xf32>
    %12 = arith.addf %6, %11 : vector<8x128xf32>
    %13 = vector.extract_strided_slice %0 {offsets = [0, 2], sizes = [8, 1], strides = [1, 1]} : vector<8x3xf32> to vector<8x1xf32>
    %14 = vector.extract_strided_slice %1 {offsets = [2, 0], sizes = [1, 128], strides = [1, 1]} : vector<3x128xf32> to vector<1x128xf32>
    %15 = vector.broadcast %13 : vector<8x1xf32> to vector<8x128xf32>
    %16 = vector.broadcast %14 : vector<1x128xf32> to vector<8x128xf32>
    %17 = arith.mulf %15, %16 : vector<8x128xf32>
    %18 = arith.addf %12, %17 : vector<8x128xf32>
    %c0_3 = arith.constant 0 : index
    %c0_4 = arith.constant 0 : index
    %19 = vector.load %arg3[%c0_3, %c0_4] : memref<1x128xf32, #tpu.memory_space<vmem>>, vector<1x128xf32>
    %20 = vector.broadcast %19 : vector<1x128xf32> to vector<8x128xf32>
    %21 = arith.addf %18, %20 : vector<8x128xf32>
    %cst = arith.constant 0.000000e+00 : f32
    %22 = vector.broadcast %cst : f32 to vector<8x128xf32>
    %23 = arith.maximumf %21, %22 : vector<8x128xf32>
    %24 = arith.truncf %23 : vector<8x128xf32> to vector<8x128xbf16>
    %c0_5 = arith.constant 0 : index
    %c0_6 = arith.constant 0 : index
    %25 = vector.load %arg4[%c0_5, %c0_6] : memref<128x64xbf16, #tpu.memory_space<vmem>>, vector<128x64xbf16>
    %cst_7 = arith.constant dense<0.000000e+00> : vector<8x64xf32>
    %26 = tpu.matmul %24, %25, %cst_7 {dimension_numbers = #tpu.dot_dimension_numbers<[1], [0], [0], [1], [0, 0, 1, 1], [], []>} : vector<8x128xbf16>, vector<128x64xbf16>, vector<8x64xf32> -> vector<8x64xf32>
    %c0_8 = arith.constant 0 : index
    %c0_9 = arith.constant 0 : index
    %27 = vector.load %arg5[%c0_8, %c0_9] : memref<1x64xf32, #tpu.memory_space<vmem>>, vector<1x64xf32>
    %28 = vector.broadcast %27 : vector<1x64xf32> to vector<8x64xf32>
    %29 = arith.addf %26, %28 : vector<8x64xf32>
    %cst_10 = arith.constant 0.000000e+00 : f32
    %30 = vector.broadcast %cst_10 : f32 to vector<8x64xf32>
    %31 = arith.maximumf %29, %30 : vector<8x64xf32>
    %32 = arith.truncf %31 : vector<8x64xf32> to vector<8x64xbf16>
    %c0_11 = arith.constant 0 : index
    %c0_12 = arith.constant 0 : index
    %33 = vector.load %arg6[%c0_11, %c0_12] : memref<64x128xbf16, #tpu.memory_space<vmem>>, vector<64x128xbf16>
    %cst_13 = arith.constant dense<0.000000e+00> : vector<8x128xf32>
    %34 = tpu.matmul %32, %33, %cst_13 {dimension_numbers = #tpu.dot_dimension_numbers<[1], [0], [0], [1], [0, 0, 1, 1], [], []>} : vector<8x64xbf16>, vector<64x128xbf16>, vector<8x128xf32> -> vector<8x128xf32>
    %35 = vector.extract_strided_slice %34 {offsets = [0, 0], sizes = [8, 8], strides = [1, 1]} : vector<8x128xf32> to vector<8x8xf32>
    %c0_14 = arith.constant 0 : index
    %c0_15 = arith.constant 0 : index
    %36 = vector.load %arg7[%c0_14, %c0_15] : memref<1x8xf32, #tpu.memory_space<vmem>>, vector<1x8xf32>
    %37 = vector.broadcast %36 : vector<1x8xf32> to vector<8x8xf32>
    %38 = arith.addf %35, %37 : vector<8x8xf32>
    %c0_16 = arith.constant 0 : index
    %c0_17 = arith.constant 0 : index
    %39 = vector.load %arg8[%c0_16, %c0_17] : memref<8x8xf32, #tpu.memory_space<vmem>>, vector<8x8xf32>
    tpu.vector_store %arg8[%c0_16, %c0_17], %38 {strides = array<i32>} : memref<8x8xf32, #tpu.memory_space<vmem>>, vector<8x8xf32>,
    return
  }
  func.func @transform_0(%arg0: i32) -> (i32, i32) {
    %c0_i32 = arith.constant 0 : i32
    %c0_i32_0 = arith.constant 0 : i32
    return %arg0, %c0_i32 : i32, i32
  }
  func.func @transform_1(%arg0: i32) -> (i32, i32) {
    %c0_i32 = arith.constant 0 : i32
    %c0_i32_0 = arith.constant 0 : i32
    %c0_i32_1 = arith.constant 0 : i32
    return %c0_i32, %c0_i32_0 : i32, i32
  }
  func.func @transform_2(%arg0: i32) -> (i32, i32) {
    %c0_i32 = arith.constant 0 : i32
    %c0_i32_0 = arith.constant 0 : i32
    %c0_i32_1 = arith.constant 0 : i32
    return %c0_i32, %c0_i32_0 : i32, i32
  }
  func.func @transform_3(%arg0: i32) -> (i32, i32) {
    %c0_i32 = arith.constant 0 : i32
    %c0_i32_0 = arith.constant 0 : i32
    %c0_i32_1 = arith.constant 0 : i32
    return %c0_i32, %c0_i32_0 : i32, i32
  }
  func.func @transform_4(%arg0: i32) -> (i32, i32) {
    %c0_i32 = arith.constant 0 : i32
    %c0_i32_0 = arith.constant 0 : i32
    %c0_i32_1 = arith.constant 0 : i32
    return %c0_i32, %c0_i32_0 : i32, i32
  }
  func.func @transform_5(%arg0: i32) -> (i32, i32) {
    %c0_i32 = arith.constant 0 : i32
    %c0_i32_0 = arith.constant 0 : i32
    %c0_i32_1 = arith.constant 0 : i32
    return %c0_i32, %c0_i32_0 : i32, i32
  }
  func.func @transform_6(%arg0: i32) -> (i32, i32) {
    %c0_i32 = arith.constant 0 : i32
    %c0_i32_0 = arith.constant 0 : i32
    %c0_i32_1 = arith.constant 0 : i32
    return %c0_i32, %c0_i32_0 : i32, i32
  }
  func.func @transform_7(%arg0: i32) -> (i32, i32) {
    %c0_i32 = arith.constant 0 : i32
    %c0_i32_0 = arith.constant 0 : i32
    return %arg0, %c0_i32 : i32, i32
  }
}

</mosaic_0001>

<llo_original>
// kernel: particle_information_net_pallas.1
$region0: #{particle_information_net_pallas.1}
  #allocation0 [shape = 'u32[]', space=smem, size = 0x4, offset = 0x4, fixed_abs, tag = 'smem constant byte address 0x4 - core index']
  #allocation1 [shape = 'u32[72,128]{1,0:T(1,128)}', space=vmem, size = 0x9000, scoped, tag = 'internal scratch']
  %s0 = inlined_call_operand.vmem [shape: f32[8,3], index: 0, kind: input, shape index: {}]
  %s1 = inlined_call_operand.vmem [shape: f32[3,128], index: 1, kind: input, shape index: {}]
  %s2 = inlined_call_operand.vmem [shape: f32[1,128], index: 2, kind: input, shape index: {}]
  %s3 = inlined_call_operand.vmem [shape: bf16[128,64], index: 3, kind: input, shape index: {}]
  %s4 = inlined_call_operand.vmem [shape: f32[1,64], index: 4, kind: input, shape index: {}]
  %s5 = inlined_call_operand.vmem [shape: bf16[64,128], index: 5, kind: input, shape index: {}]
  %s6 = inlined_call_operand.vmem [shape: f32[1,8], index: 6, kind: input, shape index: {}]
  %s7 = inlined_call_operand.hbm [shape: f32[8,8], index: 7, kind: output, shape index: {}]
  %s8 = sld [smem:[#allocation0]]
  $region38: #{particle_information_net_pallas.1} parent=0
    _
  %s10 = ssub.s32 1, %s8
  %s11 = scalar_select 0, %s10, %s8
  $region1: #{particle_information_net_pallas.1} parent=0
    #allocation2 [shape = 'u8[4096]{0}', space=vmem, size = 0x1000, scoped, tag = 'output window, operand 0, single buffered']
    #allocation3 [shape = 's32[1]{0}', space=sflag, size = 0x4, scoped, tag = 'scoped memory for particle_information_net_pallas.1']
    %12 = vsyncpa [#allocation3], 0
    // Predicated region
    $region2: #{particle_information_net_pallas.1} parent=1 // pred_check
      _
    $region3: #{particle_information_net_pallas.1} parent=1 // pred_check_branch
      %14 = sbr.rel (0) target = $region5
    $region4: #{particle_information_net_pallas.1} parent=1 // pred_region
      _
    $region5: #{particle_information_net_pallas.1} parent=1 // pred_fallthru
      _
    // Predicated region
    $region6: #{particle_information_net_pallas.1} parent=1 // pred_check
      _
    $region7: #{particle_information_net_pallas.1} parent=1 // pred_check_branch
      %16 = sbr.rel (0) target = $region9
    $region8: #{particle_information_net_pallas.1} parent=1 // pred_region
      _
    $region9: #{particle_information_net_pallas.1} parent=1 // pred_fallthru
      _
    // Predicated region
    $region10: #{particle_information_net_pallas.1} parent=1 // pred_check
      _
    $region11: #{particle_information_net_pallas.1} parent=1 // pred_check_branch
      %18 = sbr.rel (0) target = $region13
    $region12: #{particle_information_net_pallas.1} parent=1 // pred_region
      _
    $region13: #{particle_information_net_pallas.1} parent=1 // pred_fallthru
      _
    // Predicated region
    $region14: #{particle_information_net_pallas.1} parent=1 // pred_check
      _
    $region15: #{particle_information_net_pallas.1} parent=1 // pred_check_branch
      %20 = sbr.rel (0) target = $region17
    $region16: #{particle_information_net_pallas.1} parent=1 // pred_region
      _
    $region17: #{particle_information_net_pallas.1} parent=1 // pred_fallthru
      _
    // Predicated region
    $region18: #{particle_information_net_pallas.1} parent=1 // pred_check
      _
    $region19: #{particle_information_net_pallas.1} parent=1 // pred_check_branch
      %22 = sbr.rel (0) target = $region21
    $region20: #{particle_information_net_pallas.1} parent=1 // pred_region
      _
    $region21: #{particle_information_net_pallas.1} parent=1 // pred_fallthru
      _
    // Predicated region
    $region22: #{particle_information_net_pallas.1} parent=1 // pred_check
      _
    $region23: #{particle_information_net_pallas.1} parent=1 // pred_check_branch
      %24 = sbr.rel (0) target = $region25
    $region24: #{particle_information_net_pallas.1} parent=1 // pred_region
      _
    $region25: #{particle_information_net_pallas.1} parent=1 // pred_fallthru
      _
    // Predicated region
    $region26: #{particle_information_net_pallas.1} parent=1 // pred_check
      _
    $region27: #{particle_information_net_pallas.1} parent=1 // pred_check_branch
      %26 = sbr.rel (0) target = $region29
    $region28: #{particle_information_net_pallas.1} parent=1 // pred_region
      _
    $region29: #{particle_information_net_pallas.1} parent=1 // pred_fallthru
      _
    %v28 = vld [vmem:[%s0] sm:$0xff]
    %v29 = vld [vmem:[%s1] sm:$0x7]
    %31 = vset.pattern.permute.xlu0 0
    %32 = vperm.xlu0 %31, %v28
    %v33 = vpop.permute.xlu0 %32
    %v35 = vperm.slane %v29, 0
    %v36 = vmul.f32 %v33, %v35
    %37 = vset.pattern.permute.xlu0 1
    %38 = vperm.xlu0 %37, %v28
    %v39 = vpop.permute.xlu0 %38
    %v41 = vperm.slane %v29, 1
    %v42 = vmul.f32 %v39, %v41
    %v43 = vadd.f32 %v36, %v42
    %44 = vset.pattern.permute.xlu0 2
    %45 = vperm.xlu0 %44, %v28
    %v46 = vpop.permute.xlu0 %45
    %v48 = vperm.slane %v29, 2
    %v49 = vmul.f32 %v46, %v48
    %v50 = vadd.f32 %v43, %v49
    %v51 = vld [vmem:[%s2] sm:$0x1]
    %v53 = vperm.slane %v51, 0
    %v55 = vadd.f32 %v50, %v53
    %v56 = vmax.f32 %v55, 0.0
    %v57 = vpack.c.bf16 %v56, %v56
    %v58 = vld [vmem:[%s3] sm:$0xf]
    %v59 = vld [vmem:[%s3 + $0x4] sm:$0xf]
    %v60 = vld [vmem:[%s3 + $0x8] sm:$0xf]
    %v61 = vld [vmem:[%s3 + $0xc] sm:$0xf]
    %v62 = vld [vmem:[%s3 + $0x10] sm:$0xf]
    %v63 = vld [vmem:[%s3 + $0x14] sm:$0xf]
    %v64 = vld [vmem:[%s3 + $0x18] sm:$0xf]
    %v65 = vld [vmem:[%s3 + $0x1c] sm:$0xf]
    %v66 = vld [vmem:[%s3 + $0x20] sm:$0xf]
    %v67 = vld [vmem:[%s3 + $0x24] sm:$0xf]
    %v68 = vld [vmem:[%s3 + $0x28] sm:$0xf]
    %v69 = vld [vmem:[%s3 + $0x2c] sm:$0xf]
    %v70 = vld [vmem:[%s3 + $0x30] sm:$0xf]
    %v71 = vld [vmem:[%s3 + $0x34] sm:$0xf]
    %v72 = vld [vmem:[%s3 + $0x38] sm:$0xf]
    %v73 = vld [vmem:[%s3 + $0x3c] sm:$0xf]
    %v74 = vld [vmem:[%s4] sm:$0x1]
    %v76 = vperm.slane %v74, 0
    %v94 = vunpack.c.l.b16 %v58
    %v95 = vunpack.c.l.b16 %v59
    %v96 = vunpack.c.l.b16 %v60
    %v97 = vunpack.c.l.b16 %v61
    %v98 = vunpack.c.l.b16 %v62
    %v99 = vunpack.c.l.b16 %v63
    %v100 = vunpack.c.l.b16 %v64
    %v101 = vunpack.c.l.b16 %v65
    %v102 = vunpack.c.l.b16 %v66
    %v103 = vunpack.c.l.b16 %v67
    %v104 = vunpack.c.l.b16 %v68
    %v105 = vunpack.c.l.b16 %v69
    %v106 = vunpack.c.l.b16 %v70
    %v107 = vunpack.c.l.b16 %v71
    %v108 = vunpack.c.l.b16 %v72
    %v109 = vunpack.c.l.b16 %v73
    %v110 = vpack.c.b16 %v95, %v94
    %v111 = vpack.c.b16 %v97, %v96
    %v112 = vpack.c.b16 %v99, %v98
    %v113 = vpack.c.b16 %v101, %v100
    %v114 = vpack.c.b16 %v103, %v102
    %v115 = vpack.c.b16 %v105, %v104
    %v116 = vpack.c.b16 %v107, %v106
    %v117 = vpack.c.b16 %v109, %v108
    %126 = vmatpush.bf16.msra.mxu0 %v117
    %127 = vmatpush.bf16.msra.mxu0 %v116
    %128 = vmatpush.bf16.msra.mxu0 %v115
    %129 = vmatpush.bf16.msra.mxu0 %v114
    %130 = vmatpush.bf16.msra.mxu0 %v113
    %131 = vmatpush.bf16.msra.mxu0 %v112
    %132 = vmatpush.bf16.msra.mxu0 %v111
    %133 = vmatpush.bf16.msra.mxu0 %v110
    %134 = vmatmul.bf16.gmra.mxu0 %v57
    %v135 = vpop.f32.mrf.mxu0
    %v136 = vadd.f32 %v76, %v135
    %v137 = vpop.f32.mrf.mxu0
    %138 = vdwg.mxu0
    %v139 = vmax.f32 %v136, 0.0
    %v140 = vpack.c.bf16 %v139, %v139
    %v141 = vld [vmem:[%s5] sm:$0xf]
    %v142 = vld [vmem:[%s5 + $0x4] sm:$0xf]
    %v143 = vld [vmem:[%s5 + $0x8] sm:$0xf]
    %v144 = vld [vmem:[%s5 + $0xc] sm:$0xf]
    %v145 = vld [vmem:[%s5 + $0x10] sm:$0xf]
    %v146 = vld [vmem:[%s5 + $0x14] sm:$0xf]
    %v147 = vld [vmem:[%s5 + $0x18] sm:$0xf]
    %v148 = vld [vmem:[%s5 + $0x1c] sm:$0xf]
    %v157 = vunpack.c.l.b16 %v141
    %v158 = vunpack.c.l.b16 %v142
    %v159 = vunpack.c.l.b16 %v143
    %v160 = vunpack.c.l.b16 %v144
    %v161 = vunpack.c.l.b16 %v145
    %v162 = vunpack.c.l.b16 %v146
    %v163 = vunpack.c.l.b16 %v147
    %v164 = vunpack.c.l.b16 %v148
    %v165 = vpack.c.b16 %v158, %v157
    %v166 = vpack.c.b16 %v160, %v159
    %v167 = vpack.c.b16 %v162, %v161
    %v168 = vpack.c.b16 %v164, %v163
    %vm173 = vcmask 523264
    %v175 = vsel %vm173, %v140, 0
    %177 = vmatpush.bf16.msra.mxu0 0
    %178 = vmatpush.bf16.msra.mxu0 0
    %179 = vmatpush.bf16.msra.mxu0 0
    %180 = vmatpush.bf16.msra.mxu0 0
    %181 = vmatpush.bf16.msra.mxu0 %v168
    %182 = vmatpush.bf16.msra.mxu0 %v167
    %183 = vmatpush.bf16.msra.mxu0 %v166
    %184 = vmatpush.bf16.msra.mxu0 %v165
    %185 = vmatmul.bf16.gmra.mxu0 %v175
    %v186 = vpop.f32.mrf.mxu0
    %v187 = vadd.f32 0.0, %v186
    %v188 = vpop.f32.mrf.mxu0
    %189 = vdwg.mxu0
    %v190 = vld [vmem:[%s6] sm:$0x1]
    %v192 = vperm.slane %v190, 0
    %v194 = vadd.f32 %v187, %v192
    %vm195 = vcmask 64512
    %196 = vst.msk [vmem:[#allocation2] sm:$0xff] %vm195, %v194
    // Predicated region
    $region30: #{particle_information_net_pallas.1} parent=1 // pred_check
      _
    $region31: #{particle_information_net_pallas.1} parent=1 // pred_check_branch
      %198 = sbr.rel (0) target = $region33
    $region32: #{particle_information_net_pallas.1} parent=1 // pred_region
      %200 = vsyncadd [#allocation3], 0
      %s202 = sshll.u32 [#allocation2], 4
      %s203 = int_to_ptr.vmem [resolvable:$true] %s202
      %s204 = sshll.u32 %s7, 4
      %s205 = int_to_ptr.hbm [resolvable:$true] %s204
      %207 = dma.vmem_to_hbm [thread:$0]  %s203, 128, %s205, [#allocation3]
    $region33: #{particle_information_net_pallas.1} parent=1 // pred_fallthru
      _
    // Predicated region
    $region34: #{particle_information_net_pallas.1} parent=1 // pred_check
      _
    $region35: #{particle_information_net_pallas.1} parent=1 // pred_check_branch
      %209 = sbr.rel (0) target = $region37
    $region36: #{particle_information_net_pallas.1} parent=1 // pred_region
      %211 = dma.done [#allocation3], 128
    $region37: #{particle_information_net_pallas.1} parent=1 // pred_fallthru
      _
    %212 = vsyncpa [#allocation3], 1

</llo_original>
